<compile_context>
chip_gen: v7x
topology: tpu7x:2x2x1
jax: 0.10.0
libtpu: 0.0.40
codegen_flags: <defaults>
</compile_context>

<pallas_src>
import jax
import jax.numpy as jnp
from jax.experimental import pallas as pl
from jax.experimental.pallas import tpu as pltpu

_NEG_BIG = -1e30

# Optional knob (review: pl.Buffered(1) on grid-invariant inputs). After source
# tiling the only grid-invariant inputs left are tiny (bias, W, att matrices:
# <100 KiB total), so this is off by default for maximal lowering compatibility.
_SINGLE_BUFFER_INVARIANTS = False


def _device_kind() -> str:
    try:
        return jax.devices()[0].device_kind.lower()
    except Exception:
        return ""


def _elementwise_dtype():
    """bf16 logit/exp chain on v6e/v7x (bf16 VPU + EUP); f32 on v5e / unknown."""
    kind = _device_kind()
    if ("v6" in kind) or ("v7" in kind) or ("7x" in kind):
        return jnp.bfloat16
    return jnp.float32


def _vmem_limit_bytes():
    """Generation-aware scoped-VMEM budget (v7x: 64 MiB phys; v5e/v6e: 128 MiB)."""
    kind = _device_kind()
    if ("v7" in kind) or ("7x" in kind):
        return 40 * 1024 * 1024
    if ("v6" in kind) or ("v5" in kind):
        return 96 * 1024 * 1024
    return None  # unknown chip: keep compiler default


def _compiler_params(dimension_semantics):
    kwargs = dict(dimension_semantics=dimension_semantics)
    limit = _vmem_limit_bytes()
    if limit is not None:
        kwargs["vmem_limit_bytes"] = limit
    return pltpu.CompilerParams(**kwargs)


def _invariant_spec(block_shape, index_map):
    """BlockSpec for inputs whose block index never changes."""
    if _SINGLE_BUFFER_INVARIANTS:
        try:
            return pl.BlockSpec(block_shape, index_map,
                                pipeline_mode=pl.Buffered(1))
        except (TypeError, AttributeError):
            pass
    return pl.BlockSpec(block_shape, index_map)


# --------------------------------------------------------------------------
# Kernels
# --------------------------------------------------------------------------

def _projection_kernel(x_ref, w_ref, asrc_ref, adst_ref, xp_ref, as_ref, ad_ref):
    """xp = x @ W (bf16 MXU, f32 acc); a_src = xp @ Asrc; a_dst = xp @ Adst."""
    x = x_ref[...].astype(jnp.bfloat16)                              # [TM, F_in]
    xp = jnp.dot(x, w_ref[...], preferred_element_type=jnp.float32)  # [TM, H*C]
    xp_bf = xp.astype(jnp.bfloat16)
    as_ref[...] = jnp.dot(xp_bf, asrc_ref[...],
                          preferred_element_type=jnp.float32)        # [TM, H]
    ad_ref[...] = jnp.dot(xp_bf, adst_ref[...],
                          preferred_element_type=jnp.float32)        # [TM, H]
    xp_ref[...] = xp_bf


def _make_attention_kernel(H, C, activation, compute_dtype):
    """Online-softmax GAT attention over source column strips for one dst tile."""
    def kernel(adst_ref, asrcT_ref, xp_ref, bias_ref, adj_ref, o_ref,
               m_ref, l_ref, acc_ref):
        j = pl.program_id(1)

        @pl.when(j == 0)
        def _init():
            m_ref[...] = jnp.full_like(m_ref, _NEG_BIG)
            l_ref[...] = jnp.zeros_like(l_ref)
            acc_ref[...] = jnp.zeros_like(acc_ref)

        # int8 {0,1} edge mask for this (dst rows x src strip) block; cast once
        # per tile and reused by all heads (multiply-after-exp masking).
        mask = adj_ref[...].astype(compute_dtype)                    # [TM, TC]
        a_dst = adst_ref[...].astype(compute_dtype)                  # [TM, H]

        for h in range(H):
            cs = slice(h * C, (h + 1) * C)
            # logits[i, s] = a_dst[i, h] + a_src[s, h]
            logit = a_dst[:, h:h + 1] + asrcT_ref[h:h + 1, :].astype(compute_dtype)
            logit = jnp.maximum(logit, 0.2 * logit)                  # LeakyReLU(0.2)

            # Online softmax. Running max is over *unmasked* logits, which
            # upper-bounds the masked ones -> exp() never overflows.
            m_prev = m_ref[:, h:h + 1]                               # [TM, 1] f32
            m_cur = jnp.max(logit, axis=-1, keepdims=True).astype(jnp.float32)
            m_new = jnp.maximum(m_prev, m_cur)
            alpha = jnp.exp(m_prev - m_new)                          # [TM, 1] f32

            p = jnp.exp(logit - m_new.astype(compute_dtype)) * mask  # [TM, TC]
            s = jnp.sum(p.astype(jnp.float32), axis=-1, keepdims=True)
            pv = jnp.dot(p.astype(jnp.bfloat16), xp_ref[:, cs],
                         preferred_element_type=jnp.float32)         # [TM, C]

            # Denominator is stored broadcast across each head's C columns so the
            # finalize below is one full-width multiply (no reshape/concat).
            l_ref[:, cs] = alpha * l_ref[:, cs] + s
            acc_ref[:, cs] = alpha * acc_ref[:, cs] + pv
            m_ref[:, h:h + 1] = m_new

        @pl.when(j == pl.num_programs(1) - 1)
        def _finalize():
            inv = pl.reciprocal(l_ref[...], approx=True)             # [TM, HC] f32
            out = acc_ref[...] * inv + bias_ref[...]                 # norm + bias once
            if activation == "relu":
                out = jnp.maximum(out, 0.0)
            elif activation == "log_softmax":                        # H == 1 layer
                mm = jnp.max(out, axis=-1, keepdims=True)
                z = out - mm
                out = z - jnp.log(jnp.sum(jnp.exp(z), axis=-1, keepdims=True))
            o_ref[...] = out.astype(o_ref.dtype)                     # single lane-dense store

    return kernel


# --------------------------------------------------------------------------
# Layer / model wrappers
# --------------------------------------------------------------------------

def gat_layer(x, w, att_src, att_dst, bias, adj, *, heads, out_channels,
              activation, row_tile, col_tile, compute_dtype):
    """One GATConv layer (concat=True): projection + streamed attention."""
    N_pad = x.shape[0]
    H, C = heads, out_channels
    HC = H * C
    assert N_pad % row_tile == 0 and N_pad % col_tile == 0
    if activation == "log_softmax":
        assert H == 1, "log_softmax layer is single-head in HemaGraph"
    n_row = N_pad // row_tile
    n_col = N_pad // col_tile

    # Block-diagonal [HC, H] matrices: alpha = xp @ A does the per-head
    # attention dot products on the MXU.
    def block_diag(att):
        eye = jnp.eye(H, dtype=jnp.float32)
        return (att.astype(jnp.float32)[:, :, None] * eye[:, None, :]).reshape(HC, H)

    a_src_mat = block_diag(att_src).astype(jnp.bfloat16)
    a_dst_mat = block_diag(att_dst).astype(jnp.bfloat16)
    w_bf = w.astype(jnp.bfloat16)
    bias2d = bias.reshape(1, HC).astype(jnp.float32)

    # ---- projection kernel: row-tiled, fully parallel ----
    xp, a_src, a_dst = pl.pallas_call(
        _projection_kernel,
        out_shape=(
            jax.ShapeDtypeStruct((N_pad, HC), jnp.bfloat16),
            jax.ShapeDtypeStruct((N_pad, H), jnp.float32),
            jax.ShapeDtypeStruct((N_pad, H), jnp.float32),
        ),
        grid=(n_row,),
        in_specs=[
            pl.BlockSpec((row_tile, x.shape[1]), lambda i: (i, 0)),
            _invariant_spec(w_bf.shape, lambda i: (0, 0)),
            _invariant_spec(a_src_mat.shape, lambda i: (0, 0)),
            _invariant_spec(a_dst_mat.shape, lambda i: (0, 0)),
        ],
        out_specs=(
            pl.BlockSpec((row_tile, HC), lambda i: (i, 0)),
            pl.BlockSpec((row_tile, H), lambda i: (i, 0)),
            pl.BlockSpec((row_tile, H), lambda i: (i, 0)),
        ),
        compiler_params=_compiler_params(("parallel",)),
    )(x, w_bf, a_src_mat, a_dst_mat)

    # Tiny (N_pad, H) -> (H, N_pad) transpose in plain XLA so the attention
    # kernel reads lane-dense (H, col_tile) strips per source block.
    # TODO(synk): emit a_src pre-transposed from the projection kernel to drop
    # this (negligible) XLA op + HBM round trip.
    a_src_t = a_src.T

    kernel = _make_attention_kernel(H, C, activation, compute_dtype)
    out_dtype = jnp.float32 if activation == "log_softmax" else jnp.bfloat16

    # ---- attention kernel: (dst-row "parallel") x (src-col "arbitrary") ----
    out = pl.pallas_call(
        kernel,
        out_shape=jax.ShapeDtypeStruct((N_pad, HC), out_dtype),
        grid=(n_row, n_col),
        in_specs=[
            pl.BlockSpec((row_tile, H), lambda i, j: (i, 0)),         # a_dst rows
            pl.BlockSpec((H, col_tile), lambda i, j: (0, j)),         # a_src^T strip
            pl.BlockSpec((col_tile, HC), lambda i, j: (j, 0)),        # xp strip (bf16)
            _invariant_spec((1, HC), lambda i, j: (0, 0)),            # bias
            pl.BlockSpec((row_tile, col_tile), lambda i, j: (i, j)),  # adj block (int8)
        ],
        out_specs=pl.BlockSpec((row_tile, HC), lambda i, j: (i, 0)),
        scratch_shapes=[
            pltpu.VMEM((row_tile, H), jnp.float32),    # running max per head
            pltpu.VMEM((row_tile, HC), jnp.float32),   # running denominator
            pltpu.VMEM((row_tile, HC), jnp.float32),   # running numerator
        ],
        compiler_params=_compiler_params(("parallel", "arbitrary")),
    )(a_dst, a_src_t, xp, bias2d, adj)

    return out


def hemagraph_forward(x, edge_index, params, *, row_tile=256, col_tile=512):
    """HemaGraph: GAT -> ReLU -> (dropout=id) -> GAT -> ReLU -> GAT -> log_softmax.

    row_tile / col_tile guidance: 256 / 512-1024 on v5e/v6e (128 MiB VMEM),
    128-256 / 512 on v7x (64 MiB VMEM); keep the number of row tiles >= 2 so
    the "parallel" grid axis feeds both v7x TensorCores.
    """
    N, F = x.shape
    assert max(row_tile, col_tile) % min(row_tile, col_tile) == 0, \
        "row_tile and col_tile must divide each other (use powers of two)"
    pad_to = max(row_tile, col_tile)
    N_pad = ((N + pad_to - 1) // pad_to) * pad_to

    compute_dtype = _elementwise_dtype()

    # Dense int8 adjacency, built ONCE and reused by all three layers.
    # adj[dst, src] = 1; self-loops on the full padded diagonal so every row
    # (including padding) has a non-empty softmax -> no NaNs.
    diag = jnp.arange(N_pad, dtype=jnp.int32)
    adj = jnp.zeros((N_pad, N_pad), jnp.int8)
    adj = adj.at[edge_index[1], edge_index[0]].set(1)
    adj = adj.at[diag, diag].set(1)

    x_pad = jnp.zeros((N_pad, F), x.dtype).at[:N].set(x)

    H1, C1 = params["as1"].shape
    H2, C2 = params["as2"].shape
    H3, C3 = params["as3"].shape

    h = gat_layer(x_pad, params["w1"], params["as1"], params["ad1"], params["b1"],
                  adj, heads=H1, out_channels=C1, activation="relu",
                  row_tile=row_tile, col_tile=col_tile, compute_dtype=compute_dtype)
    # Dropout(0.4): identity in eval mode.
    h = gat_layer(h, params["w2"], params["as2"], params["ad2"], params["b2"],
                  adj, heads=H2, out_channels=C2, activation="relu",
                  row_tile=row_tile, col_tile=col_tile, compute_dtype=compute_dtype)
    out = gat_layer(h, params["w3"], params["as3"], params["ad3"], params["b3"],
                    adj, heads=H3, out_channels=C3, activation="log_softmax",
                    row_tile=row_tile, col_tile=col_tile, compute_dtype=compute_dtype)
    return out[:N]  # [N, num_classes] log-probabilities


def init_params(key, num_features, num_classes, hidden_channels=16, num_heads=8):
    ks = jax.random.split(key, 9)
    H, C = num_heads, hidden_channels
    scale = 0.1
    return {
        "w1": scale * jax.random.normal(ks[0], (num_features, H * C), jnp.float32),
        "as1": scale * jax.random.normal(ks[1], (H, C), jnp.float32),
        "ad1": scale * jax.random.normal(ks[2], (H, C), jnp.float32),
        "b1": jnp.zeros((H * C,), jnp.float32),
        "w2": scale * jax.random.normal(ks[3], (H * C, H * C), jnp.float32),
        "as2": scale * jax.random.normal(ks[4], (H, C), jnp.float32),
        "ad2": scale * jax.random.normal(ks[5], (H, C), jnp.float32),
        "b2": jnp.zeros((H * C,), jnp.float32),
        "w3": scale * jax.random.normal(ks[6], (H * C, num_classes), jnp.float32),
        "as3": scale * jax.random.normal(ks[7], (1, num_classes), jnp.float32),
        "ad3": scale * jax.random.normal(ks[8], (1, num_classes), jnp.float32),
        "b3": jnp.zeros((num_classes,), jnp.float32),
    }


# --------------------------------------------------------------------------
# Pure-JAX f32 reference (same dense/dedup adjacency semantics as the kernel)
# --------------------------------------------------------------------------

def _reference_forward(x, edge_index, params):
    N = x.shape[0]
    adj = jnp.zeros((N, N), jnp.float32)
    adj = adj.at[edge_index[1], edge_index[0]].set(1.0)
    adj = adj.at[jnp.arange(N), jnp.arange(N)].set(1.0)

    def layer(h, w, a_s, a_d, b, act):
        H, C = a_s.shape
        xp = h.astype(jnp.float32) @ w
        xph = xp.reshape(N, H, C)
        asrc = jnp.einsum("nhc,hc->nh", xph, a_s)
        adst = jnp.einsum("nhc,hc->nh", xph, a_d)
        logit = adst[:, None, :] + asrc[None, :, :]          # [dst, src, H]
        logit = jnp.where(logit >= 0, logit, 0.2 * logit)
        logit = jnp.where(adj[:, :, None] > 0, logit, -1e30)
        attn = jax.nn.softmax(logit, axis=1)
        out = jnp.einsum("ish,shc->ihc", attn, xph).reshape(N, H * C) + b
        if act == "relu":
            out = jnp.maximum(out, 0.0)
        return out

    h = layer(x, params["w1"], params["as1"], params["ad1"], params["b1"], "relu")
    h = layer(h, params["w2"], params["as2"], params["ad2"], params["b2"], "relu")
    h = layer(h, params["w3"], params["as3"], params["ad3"], params["b3"], "none")
    return jax.nn.log_softmax(h, axis=1)


if __name__ == "__main__":
    num_features = 8
    num_classes = 5
    N = 200          # nodes
    # Small tiles so the toy graph exercises a multi-tile grid on both axes
    # (N_pad=256 -> 4 destination row tiles x 2 source column strips).
    row_tile = 64
    col_tile = 128

    key = jax.random.PRNGKey(0)
    kx, ke1, ke2, kp = jax.random.split(key, 4)

    # Node features [N, num_features]
    x = jax.random.normal(kx, (N, num_features), jnp.float32)

    # Edge index [2, E]: a ring plus random extra edges (deterministic).
    ring_src = jnp.arange(N, dtype=jnp.int32)
    ring_dst = (ring_src + 1) % N
    extra_src = jax.random.randint(ke1, (256,), 0, N, dtype=jnp.int32)
    extra_dst = jax.random.randint(ke2, (256,), 0, N, dtype=jnp.int32)
    edge_index = jnp.stack([
        jnp.concatenate([ring_src, extra_src]),
        jnp.concatenate([ring_dst, extra_dst]),
    ])  # [2, 456]

    params = init_params(kp, num_features, num_classes)

    out = hemagraph_forward(x, edge_index, params,
                            row_tile=row_tile, col_tile=col_tile)
    out = jax.block_until_ready(out)

    assert out.shape == (N, num_classes), out.shape
    # log_softmax rows exponentiate and sum to ~1
    row_sums = jnp.sum(jnp.exp(out), axis=1)
    assert bool(jnp.all(jnp.abs(row_sums - 1.0) < 1e-2)), row_sums
    # compare against a pure-JAX f32 dense reference (bf16 MXU + bf16
    # elementwise on v6e/v7x + approx reciprocal => loose tolerance)
    ref = _reference_forward(x, edge_index, params)
    err = float(jnp.max(jnp.abs(out.astype(jnp.float32) - ref)))
    assert err < 0.2, f"max |kernel - reference| = {err}"

    print("KERNEL_OK")
</pallas_src>

<mosaic_0001>
module attributes {stable_mosaic.version = 11 : i64} {
  func.func @_projection_kernel(%arg0: i32, %arg1: memref<64x8xf32, #tpu.memory_space<vmem>>, %arg2: memref<8x128xbf16, #tpu.memory_space<vmem>>, %arg3: memref<128x8xbf16, #tpu.memory_space<vmem>>, %arg4: memref<128x8xbf16, #tpu.memory_space<vmem>>, %arg5: memref<64x128xbf16, #tpu.memory_space<vmem>>, %arg6: memref<64x8xf32, #tpu.memory_space<vmem>>, %arg7: memref<64x8xf32, #tpu.memory_space<vmem>>) attributes {dimension_semantics = [#tpu.dimension_semantics<parallel>], iteration_bounds = array<i64: 4>, scalar_prefetch = 0 : i64, scratch_operands = 0 : i64, tpu.core_type = #tpu.core_type<tc>, window_params = [{transform_indices = @transform_0, window_bounds = array<i64: 64, 8>}, {pipeline_mode = #tpu.pipeline_mode<synchronous>, transform_indices = @transform_1, window_bounds = array<i64: 8, 128>}, {pipeline_mode = #tpu.pipeline_mode<synchronous>, transform_indices = @transform_2, window_bounds = array<i64: 128, 8>}, {pipeline_mode = #tpu.pipeline_mode<synchronous>, transform_indices = @transform_3, window_bounds = array<i64: 128, 8>}, {transform_indices = @transform_4, window_bounds = array<i64: 64, 128>}, {transform_indices = @transform_5, window_bounds = array<i64: 64, 8>}, {transform_indices = @transform_6, window_bounds = array<i64: 64, 8>}]} {
    %c0 = arith.constant 0 : index
    %c0_0 = arith.constant 0 : index
    %0 = vector.load %arg1[%c0, %c0_0] : memref<64x8xf32, #tpu.memory_space<vmem>>, vector<64x8xf32>
    %1 = arith.truncf %0 : vector<64x8xf32> to vector<64x8xbf16>
    %c0_1 = arith.constant 0 : index
    %c0_2 = arith.constant 0 : index
    %2 = vector.load %arg2[%c0_1, %c0_2] : memref<8x128xbf16, #tpu.memory_space<vmem>>, vector<8x128xbf16>
    %cst = arith.constant dense<0.000000e+00> : vector<64x128xf32>
    %3 = tpu.matmul %1, %2, %cst {dimension_numbers = #tpu.dot_dimension_numbers<[1], [0], [0], [1], [0, 0, 1, 1], [], []>} : vector<64x8xbf16>, vector<8x128xbf16>, vector<64x128xf32> -> vector<64x128xf32>
    %4 = arith.truncf %3 : vector<64x128xf32> to vector<64x128xbf16>
    %c0_3 = arith.constant 0 : index
    %c0_4 = arith.constant 0 : index
    %5 = vector.load %arg3[%c0_3, %c0_4] : memref<128x8xbf16, #tpu.memory_space<vmem>>, vector<128x8xbf16>
    %cst_5 = arith.constant dense<0.000000e+00> : vector<64x8xf32>
    %6 = tpu.matmul %4, %5, %cst_5 {dimension_numbers = #tpu.dot_dimension_numbers<[1], [0], [0], [1], [0, 0, 1, 1], [], []>} : vector<64x128xbf16>, vector<128x8xbf16>, vector<64x8xf32> -> vector<64x8xf32>
    %c0_6 = arith.constant 0 : index
    %c0_7 = arith.constant 0 : index
    %7 = vector.load %arg6[%c0_6, %c0_7] : memref<64x8xf32, #tpu.memory_space<vmem>>, vector<64x8xf32>
    tpu.vector_store %arg6[%c0_6, %c0_7], %6 {strides = array<i32>} : memref<64x8xf32, #tpu.memory_space<vmem>>, vector<64x8xf32>,
    %c0_8 = arith.constant 0 : index
    %c0_9 = arith.constant 0 : index
    %8 = vector.load %arg4[%c0_8, %c0_9] : memref<128x8xbf16, #tpu.memory_space<vmem>>, vector<128x8xbf16>
    %cst_10 = arith.constant dense<0.000000e+00> : vector<64x8xf32>
    %9 = tpu.matmul %4, %8, %cst_10 {dimension_numbers = #tpu.dot_dimension_numbers<[1], [0], [0], [1], [0, 0, 1, 1], [], []>} : vector<64x128xbf16>, vector<128x8xbf16>, vector<64x8xf32> -> vector<64x8xf32>
    %c0_11 = arith.constant 0 : index
    %c0_12 = arith.constant 0 : index
    %10 = vector.load %arg7[%c0_11, %c0_12] : memref<64x8xf32, #tpu.memory_space<vmem>>, vector<64x8xf32>
    tpu.vector_store %arg7[%c0_11, %c0_12], %9 {strides = array<i32>} : memref<64x8xf32, #tpu.memory_space<vmem>>, vector<64x8xf32>,
    %c0_13 = arith.constant 0 : index
    %c0_14 = arith.constant 0 : index
    %11 = vector.load %arg5[%c0_13, %c0_14] : memref<64x128xbf16, #tpu.memory_space<vmem>>, vector<64x128xbf16>
    tpu.vector_store %arg5[%c0_13, %c0_14], %4 {strides = array<i32>} : memref<64x128xbf16, #tpu.memory_space<vmem>>, vector<64x128xbf16>,
    return
  }
  func.func @transform_0(%arg0: i32) -> (i32, i32) {
    %c0_i32 = arith.constant 0 : i32
    %c0_i32_0 = arith.constant 0 : i32
    return %arg0, %c0_i32 : i32, i32
  }
  func.func @transform_1(%arg0: i32) -> (i32, i32) {
    %c0_i32 = arith.constant 0 : i32
    %c0_i32_0 = arith.constant 0 : i32
    %c0_i32_1 = arith.constant 0 : i32
    return %c0_i32, %c0_i32_0 : i32, i32
  }
  func.func @transform_2(%arg0: i32) -> (i32, i32) {
    %c0_i32 = arith.constant 0 : i32
    %c0_i32_0 = arith.constant 0 : i32
    %c0_i32_1 = arith.constant 0 : i32
    return %c0_i32, %c0_i32_0 : i32, i32
  }
  func.func @transform_3(%arg0: i32) -> (i32, i32) {
    %c0_i32 = arith.constant 0 : i32
    %c0_i32_0 = arith.constant 0 : i32
    %c0_i32_1 = arith.constant 0 : i32
    return %c0_i32, %c0_i32_0 : i32, i32
  }
  func.func @transform_4(%arg0: i32) -> (i32, i32) {
    %c0_i32 = arith.constant 0 : i32
    %c0_i32_0 = arith.constant 0 : i32
    return %arg0, %c0_i32 : i32, i32
  }
  func.func @transform_5(%arg0: i32) -> (i32, i32) {
    %c0_i32 = arith.constant 0 : i32
    %c0_i32_0 = arith.constant 0 : i32
    return %arg0, %c0_i32 : i32, i32
  }
  func.func @transform_6(%arg0: i32) -> (i32, i32) {
    %c0_i32 = arith.constant 0 : i32
    %c0_i32_0 = arith.constant 0 : i32
    return %arg0, %c0_i32 : i32, i32
  }
}

</mosaic_0001>

<llo_original>
// kernel: tpu_custom_call.1
$region0: #{tpu_custom_call.1}
  #allocation0 [shape = 'u32[]', space=smem, size = 0x4, offset = 0x4, fixed_abs, tag = 'smem constant byte address 0x4 - core index']
  #allocation1 [shape = 'u32[144,128]{1,0:T(1,128)}', space=vmem, size = 0x12000, scoped, tag = 'internal scratch']
  %s0 = inlined_call_operand.vmem [shape: f32[256,8], index: 0, kind: input, shape index: {}]
  %s1 = inlined_call_operand.vmem [shape: bf16[8,128], index: 1, kind: input, shape index: {}]
  %s2 = inlined_call_operand.vmem [shape: bf16[128,8], index: 2, kind: input, shape index: {}]
  %s3 = inlined_call_operand.vmem [shape: bf16[128,8], index: 3, kind: input, shape index: {}]
  %s4 = inlined_call_operand.hbm [shape: bf16[256,128], index: 4, kind: output, shape index: {0}]
  %s5 = inlined_call_operand.vmem [shape: f32[256,8], index: 5, kind: output, shape index: {1}]
  %s6 = inlined_call_operand.vmem [shape: f32[256,8], index: 6, kind: output, shape index: {2}]
  %7 = xla_tuple %s4, %s5, %s6
  %s8 = sld [smem:[#allocation0]]
  $region65: #{tpu_custom_call.1} parent=0
    _
  %s10 = ssub.s32 1, %s8
  %s11 = scalar_select 0, %s10, %s8
  $region1: #{tpu_custom_call.1} parent=0
    #allocation2 [shape = 'u8[32768]{0}', space=vmem, size = 0x8000, scoped, tag = 'output window, operand 0']
    #allocation3 [shape = 's32[2]{0}', space=sflag, size = 0x8, scoped, tag = 'scoped memory for tpu_custom_call.1']
    %12 = vsyncpa [#allocation3], 0
    %s13 = scalar_lea.sflag [#allocation3], 1
    %14 = vsyncpa %s13, 0
    loop: start=0, step=1, limit=6
    $region2: #{tpu_custom_call.1} parent=1 // loop_pre_header
      _
    $region3: #{tpu_custom_call.1} parent=1 // loop_header
      %s16 = sphi 0, %s20
      %p17 = scmp.ge.s32.totalorder %s16, 6
      %s26 = sphi 0, %s28
      %s29 = sphi 0, %s26
      %s30 = sphi 0, %s29
      %s46 = sphi 0, %s30
      %s50 = sphi 0, %s50
      %s52 = sphi 0, %s50
      %s53 = sphi 0, %s52
      %s67 = sphi 0, %s53
      %s71 = sphi 0, %s71
      %s73 = sphi 0, %s71
      %s74 = sphi 0, %s73
      %s88 = sphi 0, %s74
      %s92 = sphi 0, %s92
      %s94 = sphi 0, %s92
      %s95 = sphi 0, %s94
      %s109 = sphi 0, %s95
      %s115 = sphi 0, %s117
      %s118 = sphi 0, %s115
      %s119 = sphi 0, %s118
      %s135 = sphi 0, %s119
      %s141 = sphi 0, %s143
      %s144 = sphi 0, %s141
      %s145 = sphi 0, %s144
      %s161 = sphi 0, %s145
      %s167 = sphi 0, %s169
      %s170 = sphi 0, %s167
      %s171 = sphi 0, %s170
      %s187 = sphi 0, %s171
    $region4: #{tpu_custom_call.1} parent=1 // loop_header_branch
      %19 = sbr.rel (%p17) target = $region8
    $region5: #{tpu_custom_call.1} parent=1 // loop_body
      %s21 = ssub.s32 %s16, 1
      %s22 = ssub.s32 %s16, 2
      %s23 = sadd.s32 %s16, 1
      %s24 = ssub.s32 %s16, %s23
      %p25 = scmp.eq.s32.totalorder %s24, 0
      %s27 = sadd.s32 %s26, 1
      %s28 = scalar_select %p25, %s26, %s27
      %p31 = pneg %p25
      %p32 = scmp.eq.s32.totalorder %s16, 3
      %p33 = por %p31, %p32
      %p34 = scmp.ne.s32.totalorder %s26, %s29
      %p35 = scmp.eq.s32.totalorder %s16, 0
      %p36 = por %p34, %p35
      %p37 = scmp.ne.s32.totalorder %s26, %s29
      %p38 = scmp.eq.s32.totalorder %s21, 3
      %p39 = por %p37, %p38
      %p40 = scmp.ne.s32.totalorder %s29, %s30
      %p41 = scmp.eq.s32.totalorder %s21, 0
      %p42 = por %p40, %p41
      %p43 = scmp.ne.s32.totalorder %s29, %s30
      %p44 = scmp.eq.s32.totalorder %s22, 3
      %p45 = por %p43, %p44
      %p47 = scmp.ne.s32.totalorder %s30, %s46
      %p48 = scmp.eq.s32.totalorder %s22, 0
      %p49 = por %p47, %p48
      %s51 = sadd.s32 %s50, 1
      %p54 = scmp.eq.s32.totalorder %s16, 3
      %p55 = scmp.ne.s32.totalorder %s50, %s52
      %p56 = scmp.eq.s32.totalorder %s16, 0
      %p57 = por %p55, %p56
      %p58 = scmp.ne.s32.totalorder %s50, %s52
      %p59 = scmp.eq.s32.totalorder %s21, 3
      %p60 = por %p58, %p59
      %p61 = scmp.ne.s32.totalorder %s52, %s53
      %p62 = scmp.eq.s32.totalorder %s21, 0
      %p63 = por %p61, %p62
      %p64 = scmp.ne.s32.totalorder %s52, %s53
      %p65 = scmp.eq.s32.totalorder %s22, 3
      %p66 = por %p64, %p65
      %p68 = scmp.ne.s32.totalorder %s53, %s67
      %p69 = scmp.eq.s32.totalorder %s22, 0
      %p70 = por %p68, %p69
      %s72 = sadd.s32 %s71, 1
      %p75 = scmp.eq.s32.totalorder %s16, 3
      %p76 = scmp.ne.s32.totalorder %s71, %s73
      %p77 = scmp.eq.s32.totalorder %s16, 0
      %p78 = por %p76, %p77
      %p79 = scmp.ne.s32.totalorder %s71, %s73
      %p80 = scmp.eq.s32.totalorder %s21, 3
      %p81 = por %p79, %p80
      %p82 = scmp.ne.s32.totalorder %s73, %s74
      %p83 = scmp.eq.s32.totalorder %s21, 0
      %p84 = por %p82, %p83
      %p85 = scmp.ne.s32.totalorder %s73, %s74
      %p86 = scmp.eq.s32.totalorder %s22, 3
      %p87 = por %p85, %p86
      %p89 = scmp.ne.s32.totalorder %s74, %s88
      %p90 = scmp.eq.s32.totalorder %s22, 0
      %p91 = por %p89, %p90
      %s93 = sadd.s32 %s92, 1
      %p96 = scmp.eq.s32.totalorder %s16, 3
      %p97 = scmp.ne.s32.totalorder %s92, %s94
      %p98 = scmp.eq.s32.totalorder %s16, 0
      %p99 = por %p97, %p98
      %p100 = scmp.ne.s32.totalorder %s92, %s94
      %p101 = scmp.eq.s32.totalorder %s21, 3
      %p102 = por %p100, %p101
      %p103 = scmp.ne.s32.totalorder %s94, %s95
      %p104 = scmp.eq.s32.totalorder %s21, 0
      %p105 = por %p103, %p104
      %p106 = scmp.ne.s32.totalorder %s94, %s95
      %p107 = scmp.eq.s32.totalorder %s22, 3
      %p108 = por %p106, %p107
      %p110 = scmp.ne.s32.totalorder %s95, %s109
      %p111 = scmp.eq.s32.totalorder %s22, 0
      %p112 = por %p110, %p111
      %s113 = ssub.s32 %s16, %s23
      %p114 = scmp.eq.s32.totalorder %s113, 0
      %s116 = sadd.s32 %s115, 1
      %s117 = scalar_select %p114, %s115, %s116
      %p120 = pneg %p114
      %p121 = scmp.eq.s32.totalorder %s16, 3
      %p122 = por %p120, %p121
      %p123 = scmp.ne.s32.totalorder %s115, %s118
      %p124 = scmp.eq.s32.totalorder %s16, 0
      %p125 = por %p123, %p124
      %p126 = scmp.ne.s32.totalorder %s115, %s118
      %p127 = scmp.eq.s32.totalorder %s21, 3
      %p128 = por %p126, %p127
      %p129 = scmp.ne.s32.totalorder %s118, %s119
      %p130 = scmp.eq.s32.totalorder %s21, 0
      %p131 = por %p129, %p130
      %p132 = scmp.ne.s32.totalorder %s118, %s119
      %p133 = scmp.eq.s32.totalorder %s22, 3
      %p134 = por %p132, %p133
      %p136 = scmp.ne.s32.totalorder %s119, %s135
      %p137 = scmp.eq.s32.totalorder %s22, 0
      %p138 = por %p136, %p137
      %s139 = ssub.s32 %s16, %s23
      %p140 = scmp.eq.s32.totalorder %s139, 0
      %s142 = sadd.s32 %s141, 1
      %s143 = scalar_select %p140, %s141, %s142
      %p146 = pneg %p140
      %p147 = scmp.eq.s32.totalorder %s16, 3
      %p148 = por %p146, %p147
      %p149 = scmp.ne.s32.totalorder %s141, %s144
      %p150 = scmp.eq.s32.totalorder %s16, 0
      %p151 = por %p149, %p150
      %p152 = scmp.ne.s32.totalorder %s141, %s144
      %p153 = scmp.eq.s32.totalorder %s21, 3
      %p154 = por %p152, %p153
      %p155 = scmp.ne.s32.totalorder %s144, %s145
      %p156 = scmp.eq.s32.totalorder %s21, 0
      %p157 = por %p155, %p156
      %p158 = scmp.ne.s32.totalorder %s144, %s145
      %p159 = scmp.eq.s32.totalorder %s22, 3
      %p160 = por %p158, %p159
      %p162 = scmp.ne.s32.totalorder %s145, %s161
      %p163 = scmp.eq.s32.totalorder %s22, 0
      %p164 = por %p162, %p163
      %s165 = ssub.s32 %s16, %s23
      %p166 = scmp.eq.s32.totalorder %s165, 0
      %s168 = sadd.s32 %s167, 1
      %s169 = scalar_select %p166, %s167, %s168
      %p172 = pneg %p166
      %p173 = scmp.eq.s32.totalorder %s16, 3
      %p174 = por %p172, %p173
      %p175 = scmp.ne.s32.totalorder %s167, %s170
      %p176 = scmp.eq.s32.totalorder %s16, 0
      %p177 = por %p175, %p176
      %p178 = scmp.ne.s32.totalorder %s167, %s170
      %p179 = scmp.eq.s32.totalorder %s21, 3
      %p180 = por %p178, %p179
      %p181 = scmp.ne.s32.totalorder %s170, %s171
      %p182 = scmp.eq.s32.totalorder %s21, 0
      %p183 = por %p181, %p182
      %p184 = scmp.ne.s32.totalorder %s170, %s171
      %p185 = scmp.eq.s32.totalorder %s22, 3
      %p186 = por %p184, %p185
      %p188 = scmp.ne.s32.totalorder %s171, %s187
      %p189 = scmp.eq.s32.totalorder %s22, 0
      %p190 = por %p188, %p189
      %p191 = scmp.le.s32.totalorder 1, %s16
      %p192 = scmp.lt.s32.totalorder %s16, 5
      %p193 = pnand %p191, %p192
      %p194 = pneg %p193
      // Predicated region
      $region9: #{tpu_custom_call.1} parent=5 // pred_check
        _
      $region10: #{tpu_custom_call.1} parent=5 // pred_check_branch
        %196 = sbr.rel (%p193) target = $region12
      $region11: #{tpu_custom_call.1} parent=5 // pred_region
        %s197 = ssub.s32 %s16, 1
        // Predicated region
        $region13: #{tpu_custom_call.1} parent=11 // pred_check
          %p198 = pneg %p63
        $region14: #{tpu_custom_call.1} parent=11 // pred_check_branch
          %200 = sbr.rel (%p198) target = $region16
        $region15: #{tpu_custom_call.1} parent=11 // pred_region
          _
        $region16: #{tpu_custom_call.1} parent=11 // pred_fallthru
          _
        // Predicated region
        $region17: #{tpu_custom_call.1} parent=11 // pred_check
          %p201 = pneg %p84
        $region18: #{tpu_custom_call.1} parent=11 // pred_check_branch
          %203 = sbr.rel (%p201) target = $region20
        $region19: #{tpu_custom_call.1} parent=11 // pred_region
          _
        $region20: #{tpu_custom_call.1} parent=11 // pred_fallthru
          _
        // Predicated region
        $region21: #{tpu_custom_call.1} parent=11 // pred_check
          %p204 = pneg %p105
        $region22: #{tpu_custom_call.1} parent=11 // pred_check_branch
          %206 = sbr.rel (%p204) target = $region24
        $region23: #{tpu_custom_call.1} parent=11 // pred_region
          _
        $region24: #{tpu_custom_call.1} parent=11 // pred_fallthru
          _
      $region12: #{tpu_custom_call.1} parent=5 // pred_fallthru
        _
      %p207 = scmp.lt.s32.totalorder %s16, 4
      // Predicated region
      $region25: #{tpu_custom_call.1} parent=5 // pred_check
        %p208 = pneg %p207
      $region26: #{tpu_custom_call.1} parent=5 // pred_check_branch
        %210 = sbr.rel (%p208) target = $region28
      $region27: #{tpu_custom_call.1} parent=5 // pred_region
        // Predicated region
        $region29: #{tpu_custom_call.1} parent=27 // pred_check
          %p211 = pneg %p36
        $region30: #{tpu_custom_call.1} parent=27 // pred_check_branch
          %213 = sbr.rel (%p211) target = $region32
        $region31: #{tpu_custom_call.1} parent=27 // pred_region
          %s214 = smul.u32 8, %s16
          %p215 = scmp.lt.s32.totalorder %s214, 31
          %s216 = scalar_select %p215, %s214, 31
          %s217 = smul.addr %s216, 8
          %s218 = scalar_lea.vmem %s0, %s217
          %s219 = smul.u32 8, %s16
        $region32: #{tpu_custom_call.1} parent=27 // pred_fallthru
          _
      $region28: #{tpu_custom_call.1} parent=5 // pred_fallthru
        _
      %p220 = scmp.le.s32.totalorder 1, %s16
      %p221 = scmp.lt.s32.totalorder %s16, 5
      %p222 = pnand %p220, %p221
      %p223 = pneg %p222
      // Predicated region
      $region33: #{tpu_custom_call.1} parent=5 // pred_check
        _
      $region34: #{tpu_custom_call.1} parent=5 // pred_check_branch
        %225 = sbr.rel (%p222) target = $region36
      $region35: #{tpu_custom_call.1} parent=5 // pred_region
        %s226 = ssub.s32 %s16, 1
        %s227 = smul.u32 8, %s21
        %p228 = scmp.lt.s32.totalorder %s227, 31
        %s229 = scalar_select %p228, %s227, 31
        %s230 = smul.addr %s229, 8
        %s231 = scalar_lea.vmem %s0, %s230
        %p232 = pneg %p42
        %p233 = pneg %p39
        %p234 = pneg %p63
        %p235 = pneg %p60
        %p236 = pneg %p84
        %p237 = pneg %p81
        %p238 = pneg %p105
        %p239 = pneg %p102
        %p240 = pneg %p131
        %p241 = pneg %p128
        %s242 = sand.u32 %s118, 1
        %s243 = scalar_lea.sflag [#allocation3], %s242
        %s244 = sand.u32 %s118, 1
        %s245 = smul.addr %s244, 32
        %s246 = scalar_lea.vmem [#allocation2], %s245
        %p247 = pneg %p157
        %p248 = pneg %p154
        %s249 = smul.u32 8, %s21
        %p250 = scmp.lt.s32.totalorder %s249, 31
        %s251 = scalar_select %p250, %s249, 31
        %s252 = smul.addr %s251, 8
        %s253 = scalar_lea.vmem %s5, %s252
        %p254 = pneg %p183
        %p255 = pneg %p180
        %s256 = smul.u32 8, %s21
        %p257 = scmp.lt.s32.totalorder %s256, 31
        %s258 = scalar_select %p257, %s256, 31
        %s259 = smul.addr %s258, 8
        %s260 = scalar_lea.vmem %s6, %s259
        %s261 = smul.u32 8, %s21
        %p262 = scmp.lt.s32.totalorder %s261, 31
        %s263 = scalar_select %p262, %s261, 31
        %s264 = smul.addr %s263, 8
        %s265 = scalar_lea.vmem %s0, %s264
        %s266 = smul.u32 8, %s21
        %s267 = smul.u32 8, %s21
        %s268 = smul.u32 8, %s21
        %p269 = scmp.lt.s32.totalorder %s268, 31
        %s270 = scalar_select %p269, %s268, 31
        %s271 = smul.addr %s270, 8
        %s272 = scalar_lea.vmem %s5, %s271
        %s273 = smul.u32 8, %s21
        %s274 = smul.u32 8, %s21
        %p275 = scmp.lt.s32.totalorder %s274, 31
        %s276 = scalar_select %p275, %s274, 31
        %s277 = smul.addr %s276, 8
        %s278 = scalar_lea.vmem %s6, %s277
        %s279 = smul.u32 8, %s21
        %v281 = vld [vmem:[%s265] sm:$0xff]
        %v282 = vld [vmem:[%s265 + $0x8] sm:$0xff]
        %v283 = vld [vmem:[%s265 + $0x10] sm:$0xff]
        %v284 = vld [vmem:[%s265 + $0x18] sm:$0xff]
        %v285 = vld [vmem:[%s265 + $0x20] sm:$0xff]
        %v286 = vld [vmem:[%s265 + $0x28] sm:$0xff]
        %v287 = vld [vmem:[%s265 + $0x30] sm:$0xff]
        %v288 = vld [vmem:[%s265 + $0x38] sm:$0xff]
        %v289 = vpack.c.bf16 %v282, %v281
        %v290 = vpack.c.bf16 %v284, %v283
        %v291 = vpack.c.bf16 %v286, %v285
        %v292 = vpack.c.bf16 %v288, %v287
        %v293 = vld [vmem:[%s1] sm:$0xf]
        %vm294 = vcmask 64512
        %v296 = vsel %vm294, %v289, 0
        %v299 = vsel %vm294, %v290, 0
        %v302 = vsel %vm294, %v291, 0
        %v305 = vsel %vm294, %v292, 0
        %vm307 = vcmask 1043456
        %v309 = vsel %vm307, %v293, 0
        %311 = vmatprep.subr.bf16.mxu0 0
        %312 = vmatpush1.bf16.msra.mxu0 %v309
        %313 = vmatprep.subr.bf16.mxu0 0
        %314 = vmatpush1.bf16.msra.mxu0 0
        %315 = vmatprep.subr.bf16.mxu0 0
        %316 = vmatpush1.bf16.msra.mxu0 0
        %317 = vmatprep.subr.bf16.mxu0 0
        %318 = vmatpush1.bf16.msra.mxu0 0
        %319 = vmatprep.subr.bf16.mxu0 0
        %320 = vmatpush1.bf16.msra.mxu0 0
        %321 = vmatprep.subr.bf16.mxu0 0
        %322 = vmatpush1.bf16.msra.mxu0 0
        %323 = vmatprep.subr.bf16.mxu0 0
        %324 = vmatpush1.bf16.msra.mxu0 0
        %325 = vmatprep.subr.bf16.mxu0 0
        %326 = vmatpush1.bf16.msra.mxu0 0
        %327 = vmatprep.subr.bf16.mxu0 0
        %328 = vmatpush1.bf16.msra.mxu0 0
        %329 = vmatprep.subr.bf16.mxu0 0
        %330 = vmatpush1.bf16.msra.mxu0 0
        %331 = vmatprep.subr.bf16.mxu0 0
        %332 = vmatpush1.bf16.msra.mxu0 0
        %333 = vmatprep.subr.bf16.mxu0 0
        %334 = vmatpush1.bf16.msra.mxu0 0
        %335 = vmatprep.subr.bf16.mxu0 0
        %336 = vmatpush1.bf16.msra.mxu0 0
        %337 = vmatprep.subr.bf16.mxu0 0
        %338 = vmatpush1.bf16.msra.mxu0 0
        %339 = vmatprep.subr.bf16.mxu0 0
        %340 = vmatpush1.bf16.msra.mxu0 0
        %341 = vmatprep.subr.bf16.mxu0 0
        %342 = vmatpush1.bf16.msra.mxu0 0
        %343 = vmatprep.mubr.bf16.mxu0 0
        %344 = vmatmul.mubr.bf16.gmra.mrb[0].mxu0 %v296
        %v345 = vpop.f32.mrb[0].mxu0
        %v346 = vadd.f32 0.0, %v345
        %v347 = vpop.f32.mrb[0].mxu0
        %v348 = vpop.f32.mrb[0].mxu0
        %v349 = vadd.f32 0.0, %v348
        %v350 = vpop.f32.mrb[0].mxu0
        %351 = vmatprep.mubr.bf16.mxu0 0
        %352 = vmatmul.mubr.bf16.gmra.mrb[0].mxu0 %v299
        %v353 = vpop.f32.mrb[0].mxu0
        %v354 = vadd.f32 0.0, %v353
        %v355 = vpop.f32.mrb[0].mxu0
        %v356 = vpop.f32.mrb[0].mxu0
        %v357 = vadd.f32 0.0, %v356
        %v358 = vpop.f32.mrb[0].mxu0
        %359 = vmatprep.mubr.bf16.mxu0 0
        %360 = vmatmul.mubr.bf16.gmra.mrb[0].mxu0 %v302
        %v361 = vpop.f32.mrb[0].mxu0
        %v362 = vadd.f32 0.0, %v361
        %v363 = vpop.f32.mrb[0].mxu0
        %v364 = vpop.f32.mrb[0].mxu0
        %v365 = vadd.f32 0.0, %v364
        %v366 = vpop.f32.mrb[0].mxu0
        %367 = vmatprep.mubr.bf16.mxu0 0
        %368 = vmatmul.mubr.bf16.gmra.mrb[0].mxu0 %v305
        %v369 = vpop.f32.mrb[0].mxu0
        %v370 = vadd.f32 0.0, %v369
        %v371 = vpop.f32.mrb[0].mxu0
        %v372 = vpop.f32.mrb[0].mxu0
        %v373 = vadd.f32 0.0, %v372
        %v374 = vpop.f32.mrb[0].mxu0
        %375 = vdwg.mxu0
        %v376 = vpack.c.bf16 %v349, %v346
        %v377 = vpack.c.bf16 %v357, %v354
        %v378 = vpack.c.bf16 %v365, %v362
        %v379 = vpack.c.bf16 %v373, %v370
        %v380 = vld [vmem:[%s2] sm:$0xf]
        %v381 = vld [vmem:[%s2 + $0x4] sm:$0xf]
        %v382 = vld [vmem:[%s2 + $0x8] sm:$0xf]
        %v383 = vld [vmem:[%s2 + $0xc] sm:$0xf]
        %v384 = vld [vmem:[%s2 + $0x10] sm:$0xf]
        %v385 = vld [vmem:[%s2 + $0x14] sm:$0xf]
        %v386 = vld [vmem:[%s2 + $0x18] sm:$0xf]
        %v387 = vld [vmem:[%s2 + $0x1c] sm:$0xf]
        %v388 = vld [vmem:[%s2 + $0x20] sm:$0xf]
        %v389 = vld [vmem:[%s2 + $0x24] sm:$0xf]
        %v390 = vld [vmem:[%s2 + $0x28] sm:$0xf]
        %v391 = vld [vmem:[%s2 + $0x2c] sm:$0xf]
        %v392 = vld [vmem:[%s2 + $0x30] sm:$0xf]
        %v393 = vld [vmem:[%s2 + $0x34] sm:$0xf]
        %v394 = vld [vmem:[%s2 + $0x38] sm:$0xf]
        %v395 = vld [vmem:[%s2 + $0x3c] sm:$0xf]
        %v412 = vunpack.c.l.b16 %v380
        %v413 = vunpack.c.l.b16 %v381
        %v414 = vunpack.c.l.b16 %v382
        %v415 = vunpack.c.l.b16 %v383
        %v416 = vunpack.c.l.b16 %v384
        %v417 = vunpack.c.l.b16 %v385
        %v418 = vunpack.c.l.b16 %v386
        %v419 = vunpack.c.l.b16 %v387
        %v420 = vunpack.c.l.b16 %v388
        %v421 = vunpack.c.l.b16 %v389
        %v422 = vunpack.c.l.b16 %v390
        %v423 = vunpack.c.l.b16 %v391
        %v424 = vunpack.c.l.b16 %v392
        %v425 = vunpack.c.l.b16 %v393
        %v426 = vunpack.c.l.b16 %v394
        %v427 = vunpack.c.l.b16 %v395
        %v428 = vpack.c.b16 %v413, %v412
        %v429 = vpack.c.b16 %v415, %v414
        %v430 = vpack.c.b16 %v417, %v416
        %v431 = vpack.c.b16 %v419, %v418
        %v432 = vpack.c.b16 %v421, %v420
        %v433 = vpack.c.b16 %v423, %v422
        %v434 = vpack.c.b16 %v425, %v424
        %v435 = vpack.c.b16 %v427, %v426
        %444 = vmatprep.subr.bf16.mxu0 0
        %445 = vmatpush1.bf16.msra.mxu0 %v428
        %446 = vmatprep.subr.bf16.mxu0 0
        %447 = vmatpush1.bf16.msra.mxu0 %v429
        %448 = vmatprep.subr.bf16.mxu0 0
        %449 = vmatpush1.bf16.msra.mxu0 %v430
        %450 = vmatprep.subr.bf16.mxu0 0
        %451 = vmatpush1.bf16.msra.mxu0 %v431
        %452 = vmatprep.subr.bf16.mxu0 0
        %453 = vmatpush1.bf16.msra.mxu0 %v432
        %454 = vmatprep.subr.bf16.mxu0 0
        %455 = vmatpush1.bf16.msra.mxu0 %v433
        %456 = vmatprep.subr.bf16.mxu0 0
        %457 = vmatpush1.bf16.msra.mxu0 %v434
        %458 = vmatprep.subr.bf16.mxu0 0
        %459 = vmatpush1.bf16.msra.mxu0 %v435
        %460 = vmatprep.subr.bf16.mxu0 0
        %461 = vmatpush1.bf16.msra.mxu0 0
        %462 = vmatprep.subr.bf16.mxu0 0
        %463 = vmatpush1.bf16.msra.mxu0 0
        %464 = vmatprep.subr.bf16.mxu0 0
        %465 = vmatpush1.bf16.msra.mxu0 0
        %466 = vmatprep.subr.bf16.mxu0 0
        %467 = vmatpush1.bf16.msra.mxu0 0
        %468 = vmatprep.subr.bf16.mxu0 0
        %469 = vmatpush1.bf16.msra.mxu0 0
        %470 = vmatprep.subr.bf16.mxu0 0
        %471 = vmatpush1.bf16.msra.mxu0 0
        %472 = vmatprep.subr.bf16.mxu0 0
        %473 = vmatpush1.bf16.msra.mxu0 0
        %474 = vmatprep.subr.bf16.mxu0 0
        %475 = vmatpush1.bf16.msra.mxu0 0
        %476 = vmatprep.mubr.bf16.mxu0 0
        %477 = vmatmul.mubr.bf16.gmra.mrb[0].mxu0 %v376
        %v478 = vpop.f32.mrb[0].mxu0
        %v479 = vadd.f32 0.0, %v478
        %v480 = vpop.f32.mrb[0].mxu0
        %v481 = vpop.f32.mrb[0].mxu0
        %v482 = vadd.f32 0.0, %v481
        %v483 = vpop.f32.mrb[0].mxu0
        %484 = vmatprep.mubr.bf16.mxu0 0
        %485 = vmatmul.mubr.bf16.gmra.mrb[0].mxu0 %v377
        %v486 = vpop.f32.mrb[0].mxu0
        %v487 = vadd.f32 0.0, %v486
        %v488 = vpop.f32.mrb[0].mxu0
        %v489 = vpop.f32.mrb[0].mxu0
        %v490 = vadd.f32 0.0, %v489
        %v491 = vpop.f32.mrb[0].mxu0
        %492 = vmatprep.mubr.bf16.mxu0 0
        %493 = vmatmul.mubr.bf16.gmra.mrb[0].mxu0 %v378
        %v494 = vpop.f32.mrb[0].mxu0
        %v495 = vadd.f32 0.0, %v494
        %v496 = vpop.f32.mrb[0].mxu0
        %v497 = vpop.f32.mrb[0].mxu0
        %v498 = vadd.f32 0.0, %v497
        %v499 = vpop.f32.mrb[0].mxu0
        %500 = vmatprep.mubr.bf16.mxu0 0
        %501 = vmatmul.mubr.bf16.gmra.mrb[0].mxu0 %v379
        %v502 = vpop.f32.mrb[0].mxu0
        %v503 = vadd.f32 0.0, %v502
        %v504 = vpop.f32.mrb[0].mxu0
        %v505 = vpop.f32.mrb[0].mxu0
        %v506 = vadd.f32 0.0, %v505
        %v507 = vpop.f32.mrb[0].mxu0
        %508 = vdwg.mxu0
        %509 = vst.msk [vmem:[%s272] sm:$0xff] %vm294, %v479
        %510 = vst.msk [vmem:[%s272 + $0x8] sm:$0xff] %vm294, %v482
        %511 = vst.msk [vmem:[%s272 + $0x10] sm:$0xff] %vm294, %v487
        %512 = vst.msk [vmem:[%s272 + $0x18] sm:$0xff] %vm294, %v490
        %513 = vst.msk [vmem:[%s272 + $0x20] sm:$0xff] %vm294, %v495
        %514 = vst.msk [vmem:[%s272 + $0x28] sm:$0xff] %vm294, %v498
        %515 = vst.msk [vmem:[%s272 + $0x30] sm:$0xff] %vm294, %v503
        %516 = vst.msk [vmem:[%s272 + $0x38] sm:$0xff] %vm294, %v506
        %v517 = vld [vmem:[%s3] sm:$0xf]
        %v518 = vld [vmem:[%s3 + $0x4] sm:$0xf]
        %v519 = vld [vmem:[%s3 + $0x8] sm:$0xf]
        %v520 = vld [vmem:[%s3 + $0xc] sm:$0xf]
        %v521 = vld [vmem:[%s3 + $0x10] sm:$0xf]
        %v522 = vld [vmem:[%s3 + $0x14] sm:$0xf]
        %v523 = vld [vmem:[%s3 + $0x18] sm:$0xf]
        %v524 = vld [vmem:[%s3 + $0x1c] sm:$0xf]
        %v525 = vld [vmem:[%s3 + $0x20] sm:$0xf]
        %v526 = vld [vmem:[%s3 + $0x24] sm:$0xf]
        %v527 = vld [vmem:[%s3 + $0x28] sm:$0xf]
        %v528 = vld [vmem:[%s3 + $0x2c] sm:$0xf]
        %v529 = vld [vmem:[%s3 + $0x30] sm:$0xf]
        %v530 = vld [vmem:[%s3 + $0x34] sm:$0xf]
        %v531 = vld [vmem:[%s3 + $0x38] sm:$0xf]
        %v532 = vld [vmem:[%s3 + $0x3c] sm:$0xf]
        %v549 = vunpack.c.l.b16 %v517
        %v550 = vunpack.c.l.b16 %v518
        %v551 = vunpack.c.l.b16 %v519
        %v552 = vunpack.c.l.b16 %v520
        %v553 = vunpack.c.l.b16 %v521
        %v554 = vunpack.c.l.b16 %v522
        %v555 = vunpack.c.l.b16 %v523
        %v556 = vunpack.c.l.b16 %v524
        %v557 = vunpack.c.l.b16 %v525
        %v558 = vunpack.c.l.b16 %v526
        %v559 = vunpack.c.l.b16 %v527
        %v560 = vunpack.c.l.b16 %v528
        %v561 = vunpack.c.l.b16 %v529
        %v562 = vunpack.c.l.b16 %v530
        %v563 = vunpack.c.l.b16 %v531
        %v564 = vunpack.c.l.b16 %v532
        %v565 = vpack.c.b16 %v550, %v549
        %v566 = vpack.c.b16 %v552, %v551
        %v567 = vpack.c.b16 %v554, %v553
        %v568 = vpack.c.b16 %v556, %v555
        %v569 = vpack.c.b16 %v558, %v557
        %v570 = vpack.c.b16 %v560, %v559
        %v571 = vpack.c.b16 %v562, %v561
        %v572 = vpack.c.b16 %v564, %v563
        %581 = vmatprep.subr.bf16.mxu0 0
        %582 = vmatpush1.bf16.msra.mxu0 %v565
        %583 = vmatprep.subr.bf16.mxu0 0
        %584 = vmatpush1.bf16.msra.mxu0 %v566
        %585 = vmatprep.subr.bf16.mxu0 0
        %586 = vmatpush1.bf16.msra.mxu0 %v567
        %587 = vmatprep.subr.bf16.mxu0 0
        %588 = vmatpush1.bf16.msra.mxu0 %v568
        %589 = vmatprep.subr.bf16.mxu0 0
        %590 = vmatpush1.bf16.msra.mxu0 %v569
        %591 = vmatprep.subr.bf16.mxu0 0
        %592 = vmatpush1.bf16.msra.mxu0 %v570
        %593 = vmatprep.subr.bf16.mxu0 0
        %594 = vmatpush1.bf16.msra.mxu0 %v571
        %595 = vmatprep.subr.bf16.mxu0 0
        %596 = vmatpush1.bf16.msra.mxu0 %v572
        %597 = vmatprep.subr.bf16.mxu0 0
        %598 = vmatpush1.bf16.msra.mxu0 0
        %599 = vmatprep.subr.bf16.mxu0 0
        %600 = vmatpush1.bf16.msra.mxu0 0
        %601 = vmatprep.subr.bf16.mxu0 0
        %602 = vmatpush1.bf16.msra.mxu0 0
        %603 = vmatprep.subr.bf16.mxu0 0
        %604 = vmatpush1.bf16.msra.mxu0 0
        %605 = vmatprep.subr.bf16.mxu0 0
        %606 = vmatpush1.bf16.msra.mxu0 0
        %607 = vmatprep.subr.bf16.mxu0 0
        %608 = vmatpush1.bf16.msra.mxu0 0
        %609 = vmatprep.subr.bf16.mxu0 0
        %610 = vmatpush1.bf16.msra.mxu0 0
        %611 = vmatprep.subr.bf16.mxu0 0
        %612 = vmatpush1.bf16.msra.mxu0 0
        %613 = vmatprep.mubr.bf16.mxu0 0
        %614 = vmatmul.mubr.bf16.gmra.mrb[0].mxu0 %v376
        %v615 = vpop.f32.mrb[0].mxu0
        %v616 = vadd.f32 0.0, %v615
        %v617 = vpop.f32.mrb[0].mxu0
        %v618 = vpop.f32.mrb[0].mxu0
        %v619 = vadd.f32 0.0, %v618
        %v620 = vpop.f32.mrb[0].mxu0
        %621 = vmatprep.mubr.bf16.mxu0 0
        %622 = vmatmul.mubr.bf16.gmra.mrb[0].mxu0 %v377
        %v623 = vpop.f32.mrb[0].mxu0
        %v624 = vadd.f32 0.0, %v623
        %v625 = vpop.f32.mrb[0].mxu0
        %v626 = vpop.f32.mrb[0].mxu0
        %v627 = vadd.f32 0.0, %v626
        %v628 = vpop.f32.mrb[0].mxu0
        %629 = vmatprep.mubr.bf16.mxu0 0
        %630 = vmatmul.mubr.bf16.gmra.mrb[0].mxu0 %v378
        %v631 = vpop.f32.mrb[0].mxu0
        %v632 = vadd.f32 0.0, %v631
        %v633 = vpop.f32.mrb[0].mxu0
        %v634 = vpop.f32.mrb[0].mxu0
        %v635 = vadd.f32 0.0, %v634
        %v636 = vpop.f32.mrb[0].mxu0
        %637 = vmatprep.mubr.bf16.mxu0 0
        %638 = vmatmul.mubr.bf16.gmra.mrb[0].mxu0 %v379
        %v639 = vpop.f32.mrb[0].mxu0
        %v640 = vadd.f32 0.0, %v639
        %v641 = vpop.f32.mrb[0].mxu0
        %v642 = vpop.f32.mrb[0].mxu0
        %v643 = vadd.f32 0.0, %v642
        %v644 = vpop.f32.mrb[0].mxu0
        %645 = vdwg.mxu0
        %646 = vst.msk [vmem:[%s278] sm:$0xff] %vm294, %v616
        %647 = vst.msk [vmem:[%s278 + $0x8] sm:$0xff] %vm294, %v619
        %648 = vst.msk [vmem:[%s278 + $0x10] sm:$0xff] %vm294, %v624
        %649 = vst.msk [vmem:[%s278 + $0x18] sm:$0xff] %vm294, %v627
        %650 = vst.msk [vmem:[%s278 + $0x20] sm:$0xff] %vm294, %v632
        %651 = vst.msk [vmem:[%s278 + $0x28] sm:$0xff] %vm294, %v635
        %652 = vst.msk [vmem:[%s278 + $0x30] sm:$0xff] %vm294, %v640
        %653 = vst.msk [vmem:[%s278 + $0x38] sm:$0xff] %vm294, %v643
        %v658 = vunpack.c.l.b16 %v376
        %v659 = vunpack.c.h.b16 %v376
        %v660 = vunpack.c.l.b16 %v377
        %v661 = vunpack.c.h.b16 %v377
        %v662 = vunpack.c.l.b16 %v378
        %v663 = vunpack.c.h.b16 %v378
        %v664 = vunpack.c.l.b16 %v379
        %v665 = vunpack.c.h.b16 %v379
        %v666 = vpack.c.b16 %v658, %v658
        %v667 = vpack.c.b16 %v659, %v659
        %v668 = vpack.c.b16 %v660, %v660
        %v669 = vpack.c.b16 %v661, %v661
        %v670 = vpack.c.b16 %v662, %v662
        %v671 = vpack.c.b16 %v663, %v663
        %v672 = vpack.c.b16 %v664, %v664
        %v673 = vpack.c.b16 %v665, %v665
        %682 = vst [vmem:[%s246] sm:$0xf] %v666
        %683 = vst [vmem:[%s246 + $0x4] sm:$0xf] %v667
        %684 = vst [vmem:[%s246 + $0x8] sm:$0xf] %v668
        %685 = vst [vmem:[%s246 + $0xc] sm:$0xf] %v669
        %686 = vst [vmem:[%s246 + $0x10] sm:$0xf] %v670
        %687 = vst [vmem:[%s246 + $0x14] sm:$0xf] %v671
        %688 = vst [vmem:[%s246 + $0x18] sm:$0xf] %v672
        %689 = vst [vmem:[%s246 + $0x1c] sm:$0xf] %v673
        %s690 = sand.u32 %s118, 1
        %s691 = scalar_lea.sflag [#allocation3], %s690
        %s692 = sand.u32 %s118, 1
        %s693 = smul.addr %s692, 32
        %s694 = scalar_lea.vmem [#allocation2], %s693
        %s695 = smul.u32 8, %s21
        %p696 = scmp.lt.s32.totalorder %s695, 31
        %s697 = scalar_select %p696, %s695, 31
        %s698 = smul.addr %s697, 8
        %s699 = scalar_lea.vmem %s5, %s698
        %s700 = smul.u32 8, %s21
        %p701 = scmp.lt.s32.totalorder %s700, 31
        %s702 = scalar_select %p701, %s700, 31
        %s703 = smul.addr %s702, 8
        %s704 = scalar_lea.vmem %s6, %s703
        // Predicated region
        $region37: #{tpu_custom_call.1} parent=35 // pred_check
          %p705 = pneg %p128
        $region38: #{tpu_custom_call.1} parent=35 // pred_check_branch
          %707 = sbr.rel (%p705) target = $region40
        $region39: #{tpu_custom_call.1} parent=35 // pred_region
          %s708 = smul.u32 8, %s21
          %s710 = ssub.s32 512, 512
          %711 = vsyncadd %s691, %s710
          %s712 = smul.addr %s708, 64
          %s713 = scalar_lea.hbm %s4, %s712
          %s714 = sshll.u32 %s694, 4
          %s715 = int_to_ptr.vmem [resolvable:$true] %s714
          %720 = dma.vmem_to_hbm [thread:$0]  %s715, 512, %s713, %s691, 64, 64, 4
        $region40: #{tpu_custom_call.1} parent=35 // pred_fallthru
          _
        // Predicated region
        $region41: #{tpu_custom_call.1} parent=35 // pred_check
          %p721 = pneg %p154
        $region42: #{tpu_custom_call.1} parent=35 // pred_check_branch
          %723 = sbr.rel (%p721) target = $region44
        $region43: #{tpu_custom_call.1} parent=35 // pred_region
          %s724 = smul.u32 8, %s21
        $region44: #{tpu_custom_call.1} parent=35 // pred_fallthru
          _
        // Predicated region
        $region45: #{tpu_custom_call.1} parent=35 // pred_check
          %p725 = pneg %p180
        $region46: #{tpu_custom_call.1} parent=35 // pred_check_branch
          %727 = sbr.rel (%p725) target = $region48
        $region47: #{tpu_custom_call.1} parent=35 // pred_region
          %s728 = smul.u32 8, %s21
        $region48: #{tpu_custom_call.1} parent=35 // pred_fallthru
          _
      $region36: #{tpu_custom_call.1} parent=5 // pred_fallthru
        _
      %p729 = scmp.le.s32.totalorder 2, %s16
      // Predicated region
      $region49: #{tpu_custom_call.1} parent=5 // pred_check
        %p730 = pneg %p729
      $region50: #{tpu_custom_call.1} parent=5 // pred_check_branch
        %732 = sbr.rel (%p730) target = $region52
      $region51: #{tpu_custom_call.1} parent=5 // pred_region
        %s733 = ssub.s32 %s16, 2
        // Predicated region
        $region53: #{tpu_custom_call.1} parent=51 // pred_check
          %p734 = pneg %p134
        $region54: #{tpu_custom_call.1} parent=51 // pred_check_branch
          %736 = sbr.rel (%p734) target = $region56
        $region55: #{tpu_custom_call.1} parent=51 // pred_region
          %s737 = sand.u32 %s119, 1
          %s738 = scalar_lea.sflag [#allocation3], %s737
          %s739 = sand.u32 %s119, 1
          %s740 = smul.addr %s739, 32
          %s741 = scalar_lea.vmem [#allocation2], %s740
          %742 = dma.done %s738, 512
        $region56: #{tpu_custom_call.1} parent=51 // pred_fallthru
          _
        // Predicated region
        $region57: #{tpu_custom_call.1} parent=51 // pred_check
          %p743 = pneg %p160
        $region58: #{tpu_custom_call.1} parent=51 // pred_check_branch
          %745 = sbr.rel (%p743) target = $region60
        $region59: #{tpu_custom_call.1} parent=51 // pred_region
          %s746 = smul.u32 8, %s22
          %p747 = scmp.lt.s32.totalorder %s746, 31
          %s748 = scalar_select %p747, %s746, 31
          %s749 = smul.addr %s748, 8
          %s750 = scalar_lea.vmem %s5, %s749
        $region60: #{tpu_custom_call.1} parent=51 // pred_fallthru
          _
        // Predicated region
        $region61: #{tpu_custom_call.1} parent=51 // pred_check
          %p751 = pneg %p186
        $region62: #{tpu_custom_call.1} parent=51 // pred_check_branch
          %753 = sbr.rel (%p751) target = $region64
        $region63: #{tpu_custom_call.1} parent=51 // pred_region
          %s754 = smul.u32 8, %s22
          %p755 = scmp.lt.s32.totalorder %s754, 31
          %s756 = scalar_select %p755, %s754, 31
          %s757 = smul.addr %s756, 8
          %s758 = scalar_lea.vmem %s6, %s757
        $region64: #{tpu_custom_call.1} parent=51 // pred_fallthru
          _
      $region52: #{tpu_custom_call.1} parent=5 // pred_fallthru
        _
    $region6: #{tpu_custom_call.1} parent=1 // loop_footer
      %s20 = sadd.s32 1, %s16
    $region7: #{tpu_custom_call.1} parent=1 // loop_footer_branch
      %15 = sbr.rel target = $region3
    $region8: #{tpu_custom_call.1} parent=1 // loop_exit
      _
    %759 = vsyncpa [#allocation3], 1
    %s760 = scalar_lea.sflag [#allocation3], 1
    %761 = vsyncpa %s760, 1

</llo_original>
